<compile_context>
chip_gen: v6e
topology: v6e:2x2x1
jax: 0.10.0
libtpu: 0.0.40
codegen_flags: <defaults>
</compile_context>

<pallas_src>
import math

import jax
import jax.numpy as jnp
from jax import lax
from jax.experimental import pallas as pl
from jax.experimental.pallas import tpu as pltpu

STATE_SIZE = 4
ACTION_SIZE = 1
HIDDEN = 128
LOG_2PI = math.log(2.0 * math.pi)


def _round_up(x, m):
    return (x + m - 1) // m * m


def _cdiv(a, b):
    return -(-a // b)


def _row_tiling(b):
    """Row (sublane) tiling: ~256-row tiles, rows padded only to a multiple of 8."""
    n_i = max(1, _cdiv(b, 256))
    t_i = _round_up(_cdiv(b, n_i), 8)
    return t_i, n_i


def _col_tiling(b):
    """Column (lane) tiling: lane-dense ~512-wide tiles; >=2 tiles when possible
    so the 'parallel' grid axis can be split across TensorCores (v7x megacore)."""
    if b <= 256:
        return _round_up(b, 128), 1
    n_j = max(2, _cdiv(b, 512))
    t_j = _round_up(_cdiv(b, n_j), 128)
    return t_j, n_j


def actor_kernel(state_ref, eps_ref,
                 w1_ref, b1_ref, wmu_ref, bmu_ref, wsig_t_ref, bsig_ref,
                 action_ref, logprob_ref, logsig_ref,
                 mu_scr, std_scr, c_scr):
    j = pl.program_id(0)          # column tile (outer, "parallel")
    i = pl.program_id(1)          # row tile    (inner, "arbitrary")
    t_i, t_j = action_ref.shape
    b_rows = mu_scr.shape[0]

    # ---- once per column tile (i == 0): sigma stats row + full mu column.
    @pl.when(i == 0)
    def _():
        # sigma for this tile's columns: state rows [j*t_j, j*t_j + t_j).
        col0 = pl.multiple_of(j * t_j, 128)
        s_cols = state_ref[pl.ds(col0, t_j), :]                          # (t_j, 4)
        h_c = jnp.clip(jnp.dot(s_cols, w1_ref[...],
                               preferred_element_type=jnp.float32)
                       + b1_ref[...], 0.0, 6.0)                          # (t_j, 128)
        # lane-major sigma row: (1, t_j) = Wsig^T contracted with h_c over HIDDEN.
        sig_lin = lax.dot_general(wsig_t_ref[...], h_c,
                                  (((1,), (1,)), ((), ())),
                                  preferred_element_type=jnp.float32)    # (1, t_j)
        sig_lin = sig_lin + bsig_ref[...]
        # numerically-stable softplus + 0.001
        sigma = (jnp.maximum(sig_lin, 0.0)
                 + jnp.log1p(jnp.exp(-jnp.abs(sig_lin))) + 0.001)
        log_sig = jnp.log(sigma)
        std_scr[...] = jnp.sqrt(sigma)            # O(B) transcendentals only
        c_scr[...] = -0.5 * (LOG_2PI + log_sig)   # pre-folded logprob constant
        logsig_ref[...] = log_sig                 # (1, t_j) row output

        # full mu column for every row tile of this j-sweep (tiny matmuls).
        s_rows = state_ref[pl.ds(0, b_rows), :]                          # (b_rows, 4)
        h_r = jnp.clip(jnp.dot(s_rows, w1_ref[...],
                               preferred_element_type=jnp.float32)
                       + b1_ref[...], 0.0, 6.0)                          # (b_rows, 128)
        mu_scr[...] = 2.0 * jnp.clip(jnp.dot(h_r, wmu_ref[...],
                                             preferred_element_type=jnp.float32)
                                     + bmu_ref[...], 0.0, 6.0)           # (b_rows, 1)

    # ---- per-(i, j) tile: pure VPU broadcast math + lane-dense stores.
    row0 = pl.multiple_of(i * t_i, 8)
    mu_tile = mu_scr[pl.ds(row0, t_i), :]                                # (t_i, 1)
    eps = eps_ref[...]                                                   # (t_i, t_j)
    action_ref[...] = mu_tile + std_scr[...] * eps    # mu over rows, std over cols
    # (action - mu)^2 / sigma == eps^2  -> no divide, no per-element log/sqrt.
    logprob_ref[...] = c_scr[...] - 0.5 * (eps * eps)


def init_params(key):
    """Deterministic PyTorch-Linear-style init (uniform(-1/sqrt(fan_in), +))."""
    k1, k2, k3, k4, k5, k6 = jax.random.split(key, 6)
    b1 = 1.0 / math.sqrt(STATE_SIZE)
    b2 = 1.0 / math.sqrt(HIDDEN)
    return {
        "w1":   jax.random.uniform(k1, (STATE_SIZE, HIDDEN), jnp.float32, -b1, b1),
        "b1":   jax.random.uniform(k2, (1, HIDDEN), jnp.float32, -b1, b1),
        "wmu":  jax.random.uniform(k3, (HIDDEN, ACTION_SIZE), jnp.float32, -b2, b2),
        "bmu":  jax.random.uniform(k4, (1, ACTION_SIZE), jnp.float32, -b2, b2),
        "wsig": jax.random.uniform(k5, (HIDDEN, ACTION_SIZE), jnp.float32, -b2, b2),
        "bsig": jax.random.uniform(k6, (1, ACTION_SIZE), jnp.float32, -b2, b2),
    }


def actor_forward(state, params, noise_key):
    """Returns (action, action_logprob, entropy) matching the torch module.

    action:   (B, B, 1)   MultivariateNormal.sample() with broadcast batch (B, B)
    logprob:  (B, B)
    entropy:  scalar
    """
    B = state.shape[0]
    t_i, n_i = _row_tiling(B)
    t_j, n_j = _col_tiling(B)
    b_rows = t_i * n_i            # rows padded to a multiple of 8 (sublane)
    b_cols = t_j * n_j            # cols padded to a multiple of 128 (lane)
    n_state = max(b_rows, b_cols)

    state_p = jnp.zeros((n_state, STATE_SIZE), jnp.float32).at[:B, :].set(
        state.astype(jnp.float32))
    # TODO(synk): torch's MultivariateNormal RNG stream cannot be reproduced; the
    # standard-normal noise comes from jax.random.  In-kernel hardware PRNG
    # (pltpu.prng_seed / stateful_normal) would remove this (B,B) HBM read but has
    # no CPU-interpret lowering, so the noise is generated here and streamed in.
    eps = jax.random.normal(noise_key, (b_rows, b_cols), jnp.float32)
    wsig_t = params["wsig"].T                    # (ACTION_SIZE, HIDDEN), lane-major

    def full(shape):
        return pl.BlockSpec(shape, lambda j, i: (0, 0))

    grid_spec = pltpu.PrefetchScalarGridSpec(
        num_scalar_prefetch=0,
        grid=(n_j, n_i),                          # j outer "parallel", i inner "arbitrary"
        in_specs=[
            full((n_state, STATE_SIZE)),                       # state (full resident)
            pl.BlockSpec((t_i, t_j), lambda j, i: (i, j)),     # eps tile
            full((STATE_SIZE, HIDDEN)),                        # w1
            full((1, HIDDEN)),                                 # b1
            full((HIDDEN, ACTION_SIZE)),                       # wmu
            full((1, ACTION_SIZE)),                            # bmu
            full((ACTION_SIZE, HIDDEN)),                       # wsig^T
            full((1, ACTION_SIZE)),                            # bsig
        ],
        out_specs=[
            pl.BlockSpec((t_i, t_j), lambda j, i: (i, j)),     # action
            pl.BlockSpec((t_i, t_j), lambda j, i: (i, j)),     # logprob
            pl.BlockSpec((1, t_j), lambda j, i: (0, j)),       # log sigma row
        ],
        scratch_shapes=[
            pltpu.VMEM((b_rows, 1), jnp.float32),   # mu column
            pltpu.VMEM((1, t_j), jnp.float32),      # sqrt(sigma) row
            pltpu.VMEM((1, t_j), jnp.float32),      # -0.5*(log(2*pi)+log(sigma)) row
        ],
    )

    cost = pl.CostEstimate(
        flops=6 * b_rows * b_cols + 2 * n_j * (t_j + b_rows) * STATE_SIZE * HIDDEN,
        transcendentals=5 * n_j * t_j,
        bytes_accessed=4 * (3 * b_rows * b_cols + n_state * STATE_SIZE + b_cols),
    )

    action_p, logprob_p, logsig_p = pl.pallas_call(
        actor_kernel,
        out_shape=(
            jax.ShapeDtypeStruct((b_rows, b_cols), jnp.float32),
            jax.ShapeDtypeStruct((b_rows, b_cols), jnp.float32),
            jax.ShapeDtypeStruct((1, b_cols), jnp.float32),
        ),
        grid_spec=grid_spec,
        compiler_params=pltpu.CompilerParams(
            # j ("parallel") shards column tiles across TensorCores (v7x);
            # i must stay "arbitrary": sigma/mu scratch and the logsig output
            # block are revisited across it.
            dimension_semantics=("parallel", "arbitrary")),
        cost_estimate=cost,
    )(state_p, eps,
      params["w1"], params["b1"], params["wmu"], params["bmu"],
      wsig_t, params["bsig"])

    action = action_p[:B, :B].reshape(B, B, ACTION_SIZE)
    logprob = logprob_p[:B, :B]
    # Entropy of MVN with event dim 1 averaged over the broadcast (B, B) batch
    # is constant along rows -> fold from the length-B log-sigma row.
    entropy = 0.5 * (1.0 + LOG_2PI) + 0.5 * jnp.mean(logsig_p[0, :B])
    return action, logprob, entropy


if __name__ == "__main__":
    key = jax.random.PRNGKey(0)
    pkey, skey, nkey = jax.random.split(key, 3)

    params = init_params(pkey)

    B = 2
    state = jax.random.normal(skey, (B, STATE_SIZE), dtype=jnp.float32)

    action, logprob, entropy = actor_forward(state, params, nkey)
    jax.block_until_ready((action, logprob, entropy))

    assert action.shape == (B, B, ACTION_SIZE)
    assert logprob.shape == (B, B)
    assert entropy.shape == ()

    # Pure-JAX reference: recompute mu/sigma and check logprob / entropy
    # consistency with the sampled action.
    h_ref = jnp.clip(state @ params["w1"] + params["b1"], 0.0, 6.0)
    mu_ref = 2.0 * jnp.clip(h_ref @ params["wmu"] + params["bmu"], 0.0, 6.0)    # (B,1)
    sig_ref = jax.nn.softplus(h_ref @ params["wsig"] + params["bsig"]) + 0.001  # (B,1)
    ent_ref = 0.5 * (1.0 + LOG_2PI) + 0.5 * jnp.mean(jnp.log(sig_ref))
    sig_row = sig_ref[:, 0][None, :]                                            # (1,B)
    lp_ref = -0.5 * ((action[..., 0] - mu_ref) ** 2 / sig_row
                     + LOG_2PI + jnp.log(sig_row))

    assert bool(jnp.all(jnp.isfinite(action)))
    assert bool(jnp.all(jnp.isfinite(logprob)))
    assert bool(jnp.allclose(entropy, ent_ref, rtol=5e-3, atol=5e-3))
    assert bool(jnp.allclose(logprob, lp_ref, rtol=5e-3, atol=5e-3))
    print("KERNEL_OK")
</pallas_src>

<mosaic_0001>
module attributes {stable_mosaic.version = 11 : i64} {
  func.func @actor_kernel(%arg0: i32, %arg1: i32, %arg2: memref<128x4xf32, #tpu.memory_space<vmem>>, %arg3: memref<8x128xf32, #tpu.memory_space<vmem>>, %arg4: memref<4x128xf32, #tpu.memory_space<vmem>>, %arg5: memref<1x128xf32, #tpu.memory_space<vmem>>, %arg6: memref<128x1xf32, #tpu.memory_space<vmem>>, %arg7: memref<1x1xf32, #tpu.memory_space<vmem>>, %arg8: memref<1x128xf32, #tpu.memory_space<vmem>>, %arg9: memref<1x1xf32, #tpu.memory_space<vmem>>, %arg10: memref<8x128xf32, #tpu.memory_space<vmem>>, %arg11: memref<8x128xf32, #tpu.memory_space<vmem>>, %arg12: memref<1x128xf32, #tpu.memory_space<vmem>>, %arg13: memref<8x1xf32, #tpu.memory_space<vmem>>, %arg14: memref<1x128xf32, #tpu.memory_space<vmem>>, %arg15: memref<1x128xf32, #tpu.memory_space<vmem>>) attributes {dimension_semantics = [#tpu.dimension_semantics<parallel>, #tpu.dimension_semantics<arbitrary>], iteration_bounds = array<i64: 1, 1>, scalar_prefetch = 0 : i64, scratch_operands = 3 : i64, tpu.core_type = #tpu.core_type<tc>, window_params = [{pipeline_mode = #tpu.pipeline_mode<synchronous>, transform_indices = @transform_0, window_bounds = array<i64: 128, 4>}, {transform_indices = @transform_1, window_bounds = array<i64: 8, 128>}, {pipeline_mode = #tpu.pipeline_mode<synchronous>, transform_indices = @transform_2, window_bounds = array<i64: 4, 128>}, {pipeline_mode = #tpu.pipeline_mode<synchronous>, transform_indices = @transform_3, window_bounds = array<i64: 1, 128>}, {pipeline_mode = #tpu.pipeline_mode<synchronous>, transform_indices = @transform_4, window_bounds = array<i64: 128, 1>}, {pipeline_mode = #tpu.pipeline_mode<synchronous>, transform_indices = @transform_5, window_bounds = array<i64: 1, 1>}, {pipeline_mode = #tpu.pipeline_mode<synchronous>, transform_indices = @transform_6, window_bounds = array<i64: 1, 128>}, {pipeline_mode = #tpu.pipeline_mode<synchronous>, transform_indices = @transform_7, window_bounds = array<i64: 1, 1>}, {transform_indices = @transform_8, window_bounds = array<i64: 8, 128>}, {transform_indices = @transform_9, window_bounds = array<i64: 8, 128>}, {transform_indices = @transform_10, window_bounds = array<i64: 1, 128>}]} {
    %c0_i32 = arith.constant 0 : i32
    %0 = arith.cmpi eq, %arg1, %c0_i32 : i32
    %1 = arith.extui %0 : i1 to i32
    %c0_i32_0 = arith.constant 0 : i32
    %2 = arith.cmpi ne, %1, %c0_i32_0 : i32
    scf.if %2 {
      %c128_i32 = arith.constant 128 : i32
      %21 = arith.muli %arg0, %c128_i32 : i32
      %22 = tpu.assume_multiple %21, 128 : i32
      %23 = arith.index_cast %22 : i32 to index
      %c0_11 = arith.constant 0 : index
      %24 = vector.load %arg2[%23, %c0_11] : memref<128x4xf32, #tpu.memory_space<vmem>>, vector<128x4xf32>
      %c0_12 = arith.constant 0 : index
      %c0_13 = arith.constant 0 : index
      %25 = vector.load %arg4[%c0_12, %c0_13] : memref<4x128xf32, #tpu.memory_space<vmem>>, vector<4x128xf32>
      %cst_14 = arith.constant dense<0.000000e+00> : vector<128x128xf32>
      %26 = tpu.matmul %24, %25, %cst_14 {dimension_numbers = #tpu.dot_dimension_numbers<[1], [0], [0], [1], [0, 0, 1, 1], [], []>} : vector<128x4xf32>, vector<4x128xf32>, vector<128x128xf32> -> vector<128x128xf32>
      %c0_15 = arith.constant 0 : index
      %c0_16 = arith.constant 0 : index
      %27 = vector.load %arg5[%c0_15, %c0_16] : memref<1x128xf32, #tpu.memory_space<vmem>>, vector<1x128xf32>
      %28 = vector.broadcast %27 : vector<1x128xf32> to vector<128x128xf32>
      %29 = arith.addf %26, %28 : vector<128x128xf32>
      %cst_17 = arith.constant 0.000000e+00 : f32
      %cst_18 = arith.constant 6.000000e+00 : f32
      %30 = vector.broadcast %cst_17 : f32 to vector<128x128xf32>
      %31 = arith.maximumf %30, %29 : vector<128x128xf32>
      %32 = vector.broadcast %cst_18 : f32 to vector<128x128xf32>
      %33 = arith.minimumf %32, %31 : vector<128x128xf32>
      %c0_19 = arith.constant 0 : index
      %c0_20 = arith.constant 0 : index
      %34 = vector.load %arg8[%c0_19, %c0_20] : memref<1x128xf32, #tpu.memory_space<vmem>>, vector<1x128xf32>
      %cst_21 = arith.constant dense<0.000000e+00> : vector<1x128xf32>
      %35 = tpu.matmul %34, %33, %cst_21 {dimension_numbers = #tpu.dot_dimension_numbers<[1], [1], [0], [0], [0, 0, 1, 0], [], []>} : vector<1x128xf32>, vector<128x128xf32>, vector<1x128xf32> -> vector<1x128xf32>
      %c0_22 = arith.constant 0 : index
      %c0_23 = arith.constant 0 : index
      %36 = vector.load %arg9[%c0_22, %c0_23] : memref<1x1xf32, #tpu.memory_space<vmem>>, vector<1x1xf32>
      %37 = vector.broadcast %36 : vector<1x1xf32> to vector<1x128xf32>
      %38 = arith.addf %35, %37 : vector<1x128xf32>
      %cst_24 = arith.constant 0.000000e+00 : f32
      %39 = vector.broadcast %cst_24 : f32 to vector<1x128xf32>
      %40 = arith.maximumf %38, %39 : vector<1x128xf32>
      %41 = math.absf %38 : vector<1x128xf32>
      %cst_25 = arith.constant 0.000000e+00 : f32
      %42 = vector.broadcast %cst_25 : f32 to vector<1x128xf32>
      %43 = arith.subf %42, %41 : vector<1x128xf32>
      %44 = math.exp %43 : vector<1x128xf32>
      %45 = math.log1p %44 : vector<1x128xf32>
      %46 = arith.addf %40, %45 : vector<1x128xf32>
      %cst_26 = arith.constant 1.000000e-03 : f32
      %47 = vector.broadcast %cst_26 : f32 to vector<1x128xf32>
      %48 = arith.addf %46, %47 : vector<1x128xf32>
      %49 = math.log %48 : vector<1x128xf32>
      %50 = math.sqrt %48 : vector<1x128xf32>
      %c0_27 = arith.constant 0 : index
      %c0_28 = arith.constant 0 : index
      %51 = vector.load %arg14[%c0_27, %c0_28] : memref<1x128xf32, #tpu.memory_space<vmem>>, vector<1x128xf32>
      tpu.vector_store %arg14[%c0_27, %c0_28], %50 {strides = array<i32>} : memref<1x128xf32, #tpu.memory_space<vmem>>, vector<1x128xf32>,
      %cst_29 = arith.constant 1.83787704 : f32
      %52 = vector.broadcast %cst_29 : f32 to vector<1x128xf32>
      %53 = arith.addf %52, %49 : vector<1x128xf32>
      %cst_30 = arith.constant -5.000000e-01 : f32
      %54 = vector.broadcast %cst_30 : f32 to vector<1x128xf32>
      %55 = arith.mulf %54, %53 : vector<1x128xf32>
      %c0_31 = arith.constant 0 : index
      %c0_32 = arith.constant 0 : index
      %56 = vector.load %arg15[%c0_31, %c0_32] : memref<1x128xf32, #tpu.memory_space<vmem>>, vector<1x128xf32>
      tpu.vector_store %arg15[%c0_31, %c0_32], %55 {strides = array<i32>} : memref<1x128xf32, #tpu.memory_space<vmem>>, vector<1x128xf32>,
      %c0_33 = arith.constant 0 : index
      %c0_34 = arith.constant 0 : index
      %57 = vector.load %arg12[%c0_33, %c0_34] : memref<1x128xf32, #tpu.memory_space<vmem>>, vector<1x128xf32>
      tpu.vector_store %arg12[%c0_33, %c0_34], %49 {strides = array<i32>} : memref<1x128xf32, #tpu.memory_space<vmem>>, vector<1x128xf32>,
      %c0_35 = arith.constant 0 : index
      %c0_36 = arith.constant 0 : index
      %58 = vector.load %arg2[%c0_35, %c0_36] : memref<128x4xf32, #tpu.memory_space<vmem>>, vector<8x4xf32>
      %c0_37 = arith.constant 0 : index
      %c0_38 = arith.constant 0 : index
      %59 = vector.load %arg4[%c0_37, %c0_38] : memref<4x128xf32, #tpu.memory_space<vmem>>, vector<4x128xf32>
      %cst_39 = arith.constant dense<0.000000e+00> : vector<8x128xf32>
      %60 = tpu.matmul %58, %59, %cst_39 {dimension_numbers = #tpu.dot_dimension_numbers<[1], [0], [0], [1], [0, 0, 1, 1], [], []>} : vector<8x4xf32>, vector<4x128xf32>, vector<8x128xf32> -> vector<8x128xf32>
      %c0_40 = arith.constant 0 : index
      %c0_41 = arith.constant 0 : index
      %61 = vector.load %arg5[%c0_40, %c0_41] : memref<1x128xf32, #tpu.memory_space<vmem>>, vector<1x128xf32>
      %62 = vector.broadcast %61 : vector<1x128xf32> to vector<8x128xf32>
      %63 = arith.addf %60, %62 : vector<8x128xf32>
      %cst_42 = arith.constant 0.000000e+00 : f32
      %cst_43 = arith.constant 6.000000e+00 : f32
      %64 = vector.broadcast %cst_42 : f32 to vector<8x128xf32>
      %65 = arith.maximumf %64, %63 : vector<8x128xf32>
      %66 = vector.broadcast %cst_43 : f32 to vector<8x128xf32>
      %67 = arith.minimumf %66, %65 : vector<8x128xf32>
      %c0_44 = arith.constant 0 : index
      %c0_45 = arith.constant 0 : index
      %68 = vector.load %arg6[%c0_44, %c0_45] : memref<128x1xf32, #tpu.memory_space<vmem>>, vector<128x1xf32>
      %cst_46 = arith.constant dense<0.000000e+00> : vector<8x1xf32>
      %69 = tpu.matmul %67, %68, %cst_46 {dimension_numbers = #tpu.dot_dimension_numbers<[1], [0], [0], [1], [0, 0, 1, 1], [], []>} : vector<8x128xf32>, vector<128x1xf32>, vector<8x1xf32> -> vector<8x1xf32>
      %c0_47 = arith.constant 0 : index
      %c0_48 = arith.constant 0 : index
      %70 = vector.load %arg7[%c0_47, %c0_48] : memref<1x1xf32, #tpu.memory_space<vmem>>, vector<1x1xf32>
      %71 = vector.broadcast %70 : vector<1x1xf32> to vector<8x1xf32>
      %72 = arith.addf %69, %71 : vector<8x1xf32>
      %cst_49 = arith.constant 0.000000e+00 : f32
      %cst_50 = arith.constant 6.000000e+00 : f32
      %73 = vector.broadcast %cst_49 : f32 to vector<8x1xf32>
      %74 = arith.maximumf %73, %72 : vector<8x1xf32>
      %75 = vector.broadcast %cst_50 : f32 to vector<8x1xf32>
      %76 = arith.minimumf %75, %74 : vector<8x1xf32>
      %cst_51 = arith.constant 2.000000e+00 : f32
      %77 = vector.broadcast %cst_51 : f32 to vector<8x1xf32>
      %78 = arith.mulf %77, %76 : vector<8x1xf32>
      %c0_52 = arith.constant 0 : index
      %c0_53 = arith.constant 0 : index
      %79 = vector.load %arg13[%c0_52, %c0_53] : memref<8x1xf32, #tpu.memory_space<vmem>>, vector<8x1xf32>
      tpu.vector_store %arg13[%c0_52, %c0_53], %78 {strides = array<i32>} : memref<8x1xf32, #tpu.memory_space<vmem>>, vector<8x1xf32>,
    } else {
    }
    %c8_i32 = arith.constant 8 : i32
    %3 = arith.muli %arg1, %c8_i32 : i32
    %4 = tpu.assume_multiple %3, 8 : i32
    %5 = arith.index_cast %4 : i32 to index
    %c0 = arith.constant 0 : index
    %6 = vector.load %arg13[%5, %c0] : memref<8x1xf32, #tpu.memory_space<vmem>>, vector<8x1xf32>
    %c0_1 = arith.constant 0 : index
    %c0_2 = arith.constant 0 : index
    %7 = vector.load %arg3[%c0_1, %c0_2] : memref<8x128xf32, #tpu.memory_space<vmem>>, vector<8x128xf32>
    %c0_3 = arith.constant 0 : index
    %c0_4 = arith.constant 0 : index
    %8 = vector.load %arg14[%c0_3, %c0_4] : memref<1x128xf32, #tpu.memory_space<vmem>>, vector<1x128xf32>
    %9 = vector.broadcast %8 : vector<1x128xf32> to vector<8x128xf32>
    %10 = arith.mulf %9, %7 : vector<8x128xf32>
    %11 = vector.broadcast %6 : vector<8x1xf32> to vector<8x128xf32>
    %12 = arith.addf %11, %10 : vector<8x128xf32>
    %c0_5 = arith.constant 0 : index
    %c0_6 = arith.constant 0 : index
    %13 = vector.load %arg10[%c0_5, %c0_6] : memref<8x128xf32, #tpu.memory_space<vmem>>, vector<8x128xf32>
    tpu.vector_store %arg10[%c0_5, %c0_6], %12 {strides = array<i32>} : memref<8x128xf32, #tpu.memory_space<vmem>>, vector<8x128xf32>,
    %c0_7 = arith.constant 0 : index
    %c0_8 = arith.constant 0 : index
    %14 = vector.load %arg15[%c0_7, %c0_8] : memref<1x128xf32, #tpu.memory_space<vmem>>, vector<1x128xf32>
    %15 = arith.mulf %7, %7 : vector<8x128xf32>
    %cst = arith.constant 5.000000e-01 : f32
    %16 = vector.broadcast %cst : f32 to vector<8x128xf32>
    %17 = arith.mulf %16, %15 : vector<8x128xf32>
    %18 = vector.broadcast %14 : vector<1x128xf32> to vector<8x128xf32>
    %19 = arith.subf %18, %17 : vector<8x128xf32>
    %c0_9 = arith.constant 0 : index
    %c0_10 = arith.constant 0 : index
    %20 = vector.load %arg11[%c0_9, %c0_10] : memref<8x128xf32, #tpu.memory_space<vmem>>, vector<8x128xf32>
    tpu.vector_store %arg11[%c0_9, %c0_10], %19 {strides = array<i32>} : memref<8x128xf32, #tpu.memory_space<vmem>>, vector<8x128xf32>,
    return
  }
  func.func @transform_0(%arg0: i32, %arg1: i32) -> (i32, i32) {
    %c0_i32 = arith.constant 0 : i32
    %c0_i32_0 = arith.constant 0 : i32
    %c0_i32_1 = arith.constant 0 : i32
    return %c0_i32, %c0_i32_0 : i32, i32
  }
  func.func @transform_1(%arg0: i32, %arg1: i32) -> (i32, i32) {
    %c0_i32 = arith.constant 0 : i32
    return %arg1, %arg0 : i32, i32
  }
  func.func @transform_2(%arg0: i32, %arg1: i32) -> (i32, i32) {
    %c0_i32 = arith.constant 0 : i32
    %c0_i32_0 = arith.constant 0 : i32
    %c0_i32_1 = arith.constant 0 : i32
    return %c0_i32, %c0_i32_0 : i32, i32
  }
  func.func @transform_3(%arg0: i32, %arg1: i32) -> (i32, i32) {
    %c0_i32 = arith.constant 0 : i32
    %c0_i32_0 = arith.constant 0 : i32
    %c0_i32_1 = arith.constant 0 : i32
    return %c0_i32, %c0_i32_0 : i32, i32
  }
  func.func @transform_4(%arg0: i32, %arg1: i32) -> (i32, i32) {
    %c0_i32 = arith.constant 0 : i32
    %c0_i32_0 = arith.constant 0 : i32
    %c0_i32_1 = arith.constant 0 : i32
    return %c0_i32, %c0_i32_0 : i32, i32
  }
  func.func @transform_5(%arg0: i32, %arg1: i32) -> (i32, i32) {
    %c0_i32 = arith.constant 0 : i32
    %c0_i32_0 = arith.constant 0 : i32
    %c0_i32_1 = arith.constant 0 : i32
    return %c0_i32, %c0_i32_0 : i32, i32
  }
  func.func @transform_6(%arg0: i32, %arg1: i32) -> (i32, i32) {
    %c0_i32 = arith.constant 0 : i32
    %c0_i32_0 = arith.constant 0 : i32
    %c0_i32_1 = arith.constant 0 : i32
    return %c0_i32, %c0_i32_0 : i32, i32
  }
  func.func @transform_7(%arg0: i32, %arg1: i32) -> (i32, i32) {
    %c0_i32 = arith.constant 0 : i32
    %c0_i32_0 = arith.constant 0 : i32
    %c0_i32_1 = arith.constant 0 : i32
    return %c0_i32, %c0_i32_0 : i32, i32
  }
  func.func @transform_8(%arg0: i32, %arg1: i32) -> (i32, i32) {
    %c0_i32 = arith.constant 0 : i32
    return %arg1, %arg0 : i32, i32
  }
  func.func @transform_9(%arg0: i32, %arg1: i32) -> (i32, i32) {
    %c0_i32 = arith.constant 0 : i32
    return %arg1, %arg0 : i32, i32
  }
  func.func @transform_10(%arg0: i32, %arg1: i32) -> (i32, i32) {
    %c0_i32 = arith.constant 0 : i32
    %c0_i32_0 = arith.constant 0 : i32
    return %c0_i32, %arg0 : i32, i32
  }
}

</mosaic_0001>

<llo_original>
// kernel: tpu_custom_call.1
$region0: #{tpu_custom_call.1}
  #allocation0 [shape = 'u32[]', space=smem, size = 0x4, offset = 0x4, fixed_abs, tag = 'smem constant byte address 0x4 - core index']
  #allocation1 [shape = 'u32[144,128]{1,0:T(1,128)}', space=vmem, size = 0x12000, scoped, tag = 'internal scratch']
  #allocation2 [shape = 'f32[8,1]{1,0:T(8,128)}', space=vmem, size = 0x1000, scoped, tag = 'scratch operand']
  #allocation3 [shape = 'f32[1,128]{1,0:T(1,128)}', space=vmem, size = 0x200, scoped, tag = 'scratch operand']
  #allocation4 [shape = 'f32[1,128]{1,0:T(1,128)}', space=vmem, size = 0x200, scoped, tag = 'scratch operand']
  #allocation5 [shape = 'f32[1,1]{1,0:T(1,128)S(1)}', space=vmem, size = 0x200, scoped, tag = 'scoped memory for tpu_custom_call.1']
  #allocation6 [shape = 'f32[1,1]{1,0:T(1,128)S(1)}', space=vmem, size = 0x200, scoped, tag = 'scoped memory for tpu_custom_call.1']
  %s0 = inlined_call_operand.vmem [shape: f32[128,4], index: 0, kind: input, shape index: {}]
  %s1 = inlined_call_operand.vmem [shape: f32[8,128], index: 1, kind: input, shape index: {}]
  %s2 = inlined_call_operand.vmem [shape: f32[4,128], index: 2, kind: input, shape index: {}]
  %s3 = inlined_call_operand.vmem [shape: f32[1,128], index: 3, kind: input, shape index: {}]
  %s4 = inlined_call_operand.vmem [shape: f32[128,1], index: 4, kind: input, shape index: {}]
  %s5 = inlined_call_operand.<no memory space> [shape: f32[1,1], index: 5, kind: input, shape index: {}]
  %s6 = inlined_call_operand.vmem [shape: f32[1,128], index: 6, kind: input, shape index: {}]
  %s7 = inlined_call_operand.<no memory space> [shape: f32[1,1], index: 7, kind: input, shape index: {}]
  %s8 = inlined_call_operand.hbm [shape: f32[8,128], index: 8, kind: output, shape index: {0}]
  %s9 = inlined_call_operand.hbm [shape: f32[8,128], index: 9, kind: output, shape index: {1}]
  %s10 = inlined_call_operand.hbm [shape: f32[1,128], index: 10, kind: output, shape index: {2}]
  %11 = xla_tuple %s8, %s9, %s10
  %s12 = sld [smem:[#allocation0]]
  $region62: #{tpu_custom_call.1} parent=0
    _
  %s14 = ssub.s32 1, %s12
  %s15 = scalar_select 0, %s14, %s12
  %v16 = vstv %s5
  %17 = vst [vmem:[#allocation5] sm:$0x1] %v16
  %v18 = vstv %s7
  %19 = vst [vmem:[#allocation6] sm:$0x1] %v18
  $region1: #{tpu_custom_call.1} parent=0
    #allocation7 [shape = 'u8[4096]{0}', space=vmem, size = 0x1000, scoped, tag = 'output window, operand 0, single buffered']
    #allocation8 [shape = 's32[1]{0}', space=sflag, size = 0x4, scoped, tag = 'scoped memory for tpu_custom_call.1']
    #allocation9 [shape = 'u8[4096]{0}', space=vmem, size = 0x1000, scoped, tag = 'output window, operand 1, single buffered']
    #allocation10 [shape = 's32[1]{0}', space=sflag, size = 0x4, scoped, tag = 'scoped memory for tpu_custom_call.1']
    #allocation11 [shape = 'u8[512]{0}', space=vmem, size = 0x400, scoped, tag = 'output window, operand 2, single buffered']
    %20 = vsyncpa [#allocation8], 0
    %21 = vsyncpa [#allocation10], 0
    // Predicated region
    $region2: #{tpu_custom_call.1} parent=1 // pred_check
      _
    $region3: #{tpu_custom_call.1} parent=1 // pred_check_branch
      %23 = sbr.rel (0) target = $region5
    $region4: #{tpu_custom_call.1} parent=1 // pred_region
      _
    $region5: #{tpu_custom_call.1} parent=1 // pred_fallthru
      _
    // Predicated region
    $region6: #{tpu_custom_call.1} parent=1 // pred_check
      _
    $region7: #{tpu_custom_call.1} parent=1 // pred_check_branch
      %25 = sbr.rel (0) target = $region9
    $region8: #{tpu_custom_call.1} parent=1 // pred_region
      _
    $region9: #{tpu_custom_call.1} parent=1 // pred_fallthru
      _
    // Predicated region
    $region10: #{tpu_custom_call.1} parent=1 // pred_check
      _
    $region11: #{tpu_custom_call.1} parent=1 // pred_check_branch
      %27 = sbr.rel (0) target = $region13
    $region12: #{tpu_custom_call.1} parent=1 // pred_region
      _
    $region13: #{tpu_custom_call.1} parent=1 // pred_fallthru
      _
    // Predicated region
    $region14: #{tpu_custom_call.1} parent=1 // pred_check
      _
    $region15: #{tpu_custom_call.1} parent=1 // pred_check_branch
      %29 = sbr.rel (0) target = $region17
    $region16: #{tpu_custom_call.1} parent=1 // pred_region
      _
    $region17: #{tpu_custom_call.1} parent=1 // pred_fallthru
      _
    // Predicated region
    $region18: #{tpu_custom_call.1} parent=1 // pred_check
      _
    $region19: #{tpu_custom_call.1} parent=1 // pred_check_branch
      %31 = sbr.rel (0) target = $region21
    $region20: #{tpu_custom_call.1} parent=1 // pred_region
      _
    $region21: #{tpu_custom_call.1} parent=1 // pred_fallthru
      _
    // Predicated region
    $region22: #{tpu_custom_call.1} parent=1 // pred_check
      _
    $region23: #{tpu_custom_call.1} parent=1 // pred_check_branch
      %33 = sbr.rel (0) target = $region25
    $region24: #{tpu_custom_call.1} parent=1 // pred_region
      _
    $region25: #{tpu_custom_call.1} parent=1 // pred_fallthru
      _
    // Predicated region
    $region26: #{tpu_custom_call.1} parent=1 // pred_check
      _
    $region27: #{tpu_custom_call.1} parent=1 // pred_check_branch
      %35 = sbr.rel (0) target = $region29
    $region28: #{tpu_custom_call.1} parent=1 // pred_region
      _
    $region29: #{tpu_custom_call.1} parent=1 // pred_fallthru
      _
    // Predicated region
    $region30: #{tpu_custom_call.1} parent=1 // pred_check
      _
    $region31: #{tpu_custom_call.1} parent=1 // pred_check_branch
      %37 = sbr.rel (0) target = $region33
    $region32: #{tpu_custom_call.1} parent=1 // pred_region
      _
    $region33: #{tpu_custom_call.1} parent=1 // pred_fallthru
      _
    %p38 = scmp.eq.s32.totalorder 0, 0
    // Predicated region
    $region34: #{tpu_custom_call.1} parent=1 // pred_check
      %p39 = pneg %p38
    $region35: #{tpu_custom_call.1} parent=1 // pred_check_branch
      %41 = sbr.rel (%p39) target = $region37
    $region36: #{tpu_custom_call.1} parent=1 // pred_region
      %s42 = smul.u32 0, 128
      %s43 = scalar_lea.vmem %s0, %s42
      %v44 = vld [vmem:[%s43] sm:$0xff]
      %v45 = vld [vmem:[%s43 + $0x8] sm:$0xff]
      %v46 = vld [vmem:[%s43 + $0x10] sm:$0xff]
      %v47 = vld [vmem:[%s43 + $0x18] sm:$0xff]
      %v48 = vld [vmem:[%s43 + $0x20] sm:$0xff]
      %v49 = vld [vmem:[%s43 + $0x28] sm:$0xff]
      %v50 = vld [vmem:[%s43 + $0x30] sm:$0xff]
      %v51 = vld [vmem:[%s43 + $0x38] sm:$0xff]
      %v52 = vld [vmem:[%s43 + $0x40] sm:$0xff]
      %v53 = vld [vmem:[%s43 + $0x48] sm:$0xff]
      %v54 = vld [vmem:[%s43 + $0x50] sm:$0xff]
      %v55 = vld [vmem:[%s43 + $0x58] sm:$0xff]
      %v56 = vld [vmem:[%s43 + $0x60] sm:$0xff]
      %v57 = vld [vmem:[%s43 + $0x68] sm:$0xff]
      %v58 = vld [vmem:[%s43 + $0x70] sm:$0xff]
      %v59 = vld [vmem:[%s43 + $0x78] sm:$0xff]
      %v60 = vld [vmem:[%s2] sm:$0xf]
      %v61 = vld [vmem:[%s3] sm:$0x1]
      %v63 = vlaneseq
      %v64 = vshrl.u32 %v63, 7
      %v65 = vsub.s32 0, %v64
      %v66 = vrot.slane %v61, %v65
      %vm68 = vcmask 31744
      %v70 = vsel %vm68, %v44, 0
      %v73 = vsel %vm68, %v45, 0
      %v76 = vsel %vm68, %v46, 0
      %v79 = vsel %vm68, %v47, 0
      %v82 = vsel %vm68, %v48, 0
      %v85 = vsel %vm68, %v49, 0
      %v88 = vsel %vm68, %v50, 0
      %v91 = vsel %vm68, %v51, 0
      %v94 = vsel %vm68, %v52, 0
      %v97 = vsel %vm68, %v53, 0
      %v100 = vsel %vm68, %v54, 0
      %v103 = vsel %vm68, %v55, 0
      %v106 = vsel %vm68, %v56, 0
      %v109 = vsel %vm68, %v57, 0
      %v112 = vsel %vm68, %v58, 0
      %v115 = vsel %vm68, %v59, 0
      %vm117 = vcmask 1043456
      %v119 = vsel %vm117, %v60, 0
      %121 = vmatprep.subr.mxu0 0.0
      %122 = vmatpush1.msra.mxu0 0.0
      %123 = vmatprep.subr.mxu0 0.0
      %124 = vmatpush1.msra.mxu0 0.0
      %125 = vmatprep.subr.mxu0 0.0
      %126 = vmatpush1.msra.mxu0 0.0
      %127 = vmatprep.subr.mxu0 0.0
      %128 = vmatpush1.msra.mxu0 0.0
      %129 = vmatprep.subr.mxu0 0.0
      %130 = vmatpush1.msra.mxu0 0.0
      %131 = vmatprep.subr.mxu0 0.0
      %132 = vmatpush1.msra.mxu0 0.0
      %133 = vmatprep.subr.mxu0 0.0
      %134 = vmatpush1.msra.mxu0 0.0
      %135 = vmatprep.subr.mxu0 0.0
      %136 = vmatpush1.msra.mxu0 0.0
      %137 = vmatprep.subr.mxu0 0.0
      %138 = vmatpush1.msra.mxu0 0.0
      %139 = vmatprep.subr.mxu0 0.0
      %140 = vmatpush1.msra.mxu0 0.0
      %141 = vmatprep.subr.mxu0 0.0
      %142 = vmatpush1.msra.mxu0 0.0
      %143 = vmatprep.subr.mxu0 0.0
      %144 = vmatpush1.msra.mxu0 0.0
      %145 = vmatprep.subr.mxu0 0.0
      %146 = vmatpush1.msra.mxu0 0.0
      %147 = vmatprep.subr.mxu0 0.0
      %148 = vmatpush1.msra.mxu0 0.0
      %149 = vmatprep.subr.mxu0 0.0
      %150 = vmatpush1.msra.mxu0 0.0
      %151 = vmatprep.subr.mxu0 0.0
      %152 = vmatpush1.msra.mxu0 %v119
      %153 = vmatprep.subr.mxu0 0.0
      %154 = vmatpush2.msra.mxu0 0.0
      %155 = vmatprep.subr.mxu0 0.0
      %156 = vmatpush2.msra.mxu0 0.0
      %157 = vmatprep.subr.mxu0 0.0
      %158 = vmatpush2.msra.mxu0 0.0
      %159 = vmatprep.subr.mxu0 0.0
      %160 = vmatpush2.msra.mxu0 0.0
      %161 = vmatprep.subr.mxu0 0.0
      %162 = vmatpush2.msra.mxu0 0.0
      %163 = vmatprep.subr.mxu0 0.0
      %164 = vmatpush2.msra.mxu0 0.0
      %165 = vmatprep.subr.mxu0 0.0
      %166 = vmatpush2.msra.mxu0 0.0
      %167 = vmatprep.subr.mxu0 0.0
      %168 = vmatpush2.msra.mxu0 0.0
      %169 = vmatprep.subr.mxu0 0.0
      %170 = vmatpush2.msra.mxu0 0.0
      %171 = vmatprep.subr.mxu0 0.0
      %172 = vmatpush2.msra.mxu0 0.0
      %173 = vmatprep.subr.mxu0 0.0
      %174 = vmatpush2.msra.mxu0 0.0
      %175 = vmatprep.subr.mxu0 0.0
      %176 = vmatpush2.msra.mxu0 0.0
      %177 = vmatprep.subr.mxu0 0.0
      %178 = vmatpush2.msra.mxu0 0.0
      %179 = vmatprep.subr.mxu0 0.0
      %180 = vmatpush2.msra.mxu0 0.0
      %181 = vmatprep.subr.mxu0 0.0
      %182 = vmatpush2.msra.mxu0 0.0
      %183 = vmatprep.subr.mxu0 0.0
      %184 = vmatpush2.msra.mxu0 0.0
      %185 = vmatprep.mubr.f32.mxu0 0.0
      %186 = vmatmul.mubr.f32.gmra.mxu0 %v70
      %v187 = vpop.f32.mrf.mxu0
      %v188 = vadd.f32 %v66, %v187
      %v189 = vpop.f32.mrf.mxu0
      %190 = vmatprep.mubr.f32.mxu0 0.0
      %191 = vmatmul.mubr.f32.gmra.mxu0 %v73
      %v192 = vpop.f32.mrf.mxu0
      %v193 = vadd.f32 %v66, %v192
      %v194 = vpop.f32.mrf.mxu0
      %195 = vmatprep.mubr.f32.mxu0 0.0
      %196 = vmatmul.mubr.f32.gmra.mxu0 %v76
      %v197 = vpop.f32.mrf.mxu0
      %v198 = vadd.f32 %v66, %v197
      %v199 = vpop.f32.mrf.mxu0
      %200 = vmatprep.mubr.f32.mxu0 0.0
      %201 = vmatmul.mubr.f32.gmra.mxu0 %v79
      %v202 = vpop.f32.mrf.mxu0
      %v203 = vadd.f32 %v66, %v202
      %v204 = vpop.f32.mrf.mxu0
      %205 = vmatprep.mubr.f32.mxu0 0.0
      %206 = vmatmul.mubr.f32.gmra.mxu0 %v82
      %v207 = vpop.f32.mrf.mxu0
      %v208 = vadd.f32 %v66, %v207
      %v209 = vpop.f32.mrf.mxu0
      %210 = vmatprep.mubr.f32.mxu0 0.0
      %211 = vmatmul.mubr.f32.gmra.mxu0 %v85
      %v212 = vpop.f32.mrf.mxu0
      %v213 = vadd.f32 %v66, %v212
      %v214 = vpop.f32.mrf.mxu0
      %215 = vmatprep.mubr.f32.mxu0 0.0
      %216 = vmatmul.mubr.f32.gmra.mxu0 %v88
      %v217 = vpop.f32.mrf.mxu0
      %v218 = vadd.f32 %v66, %v217
      %v219 = vpop.f32.mrf.mxu0
      %220 = vmatprep.mubr.f32.mxu0 0.0
      %221 = vmatmul.mubr.f32.gmra.mxu0 %v91
      %v222 = vpop.f32.mrf.mxu0
      %v223 = vadd.f32 %v66, %v222
      %v224 = vpop.f32.mrf.mxu0
      %225 = vmatprep.mubr.f32.mxu0 0.0
      %226 = vmatmul.mubr.f32.gmra.mxu0 %v94
      %v227 = vpop.f32.mrf.mxu0
      %v228 = vadd.f32 %v66, %v227
      %v229 = vpop.f32.mrf.mxu0
      %230 = vmatprep.mubr.f32.mxu0 0.0
      %231 = vmatmul.mubr.f32.gmra.mxu0 %v97
      %v232 = vpop.f32.mrf.mxu0
      %v233 = vadd.f32 %v66, %v232
      %v234 = vpop.f32.mrf.mxu0
      %235 = vmatprep.mubr.f32.mxu0 0.0
      %236 = vmatmul.mubr.f32.gmra.mxu0 %v100
      %v237 = vpop.f32.mrf.mxu0
      %v238 = vadd.f32 %v66, %v237
      %v239 = vpop.f32.mrf.mxu0
      %240 = vmatprep.mubr.f32.mxu0 0.0
      %241 = vmatmul.mubr.f32.gmra.mxu0 %v103
      %v242 = vpop.f32.mrf.mxu0
      %v243 = vadd.f32 %v66, %v242
      %v244 = vpop.f32.mrf.mxu0
      %245 = vmatprep.mubr.f32.mxu0 0.0
      %246 = vmatmul.mubr.f32.gmra.mxu0 %v106
      %v247 = vpop.f32.mrf.mxu0
      %v248 = vadd.f32 %v66, %v247
      %v249 = vpop.f32.mrf.mxu0
      %250 = vmatprep.mubr.f32.mxu0 0.0
      %251 = vmatmul.mubr.f32.gmra.mxu0 %v109
      %v252 = vpop.f32.mrf.mxu0
      %v253 = vadd.f32 %v66, %v252
      %v254 = vpop.f32.mrf.mxu0
      %255 = vmatprep.mubr.f32.mxu0 0.0
      %256 = vmatmul.mubr.f32.gmra.mxu0 %v112
      %v257 = vpop.f32.mrf.mxu0
      %v258 = vadd.f32 %v66, %v257
      %v259 = vpop.f32.mrf.mxu0
      %260 = vmatprep.mubr.f32.mxu0 0.0
      %261 = vmatmul.mubr.f32.gmra.mxu0 %v115
      %v262 = vpop.f32.mrf.mxu0
      %v263 = vadd.f32 %v66, %v262
      %v264 = vpop.f32.mrf.mxu0
      %265 = vdwg.mxu0
      %v266 = vmax.f32 %v188, 0.0
      %v267 = vmax.f32 %v193, 0.0
      %v268 = vmax.f32 %v198, 0.0
      %v269 = vmax.f32 %v203, 0.0
      %v270 = vmax.f32 %v208, 0.0
      %v271 = vmax.f32 %v213, 0.0
      %v272 = vmax.f32 %v218, 0.0
      %v273 = vmax.f32 %v223, 0.0
      %v274 = vmax.f32 %v228, 0.0
      %v275 = vmax.f32 %v233, 0.0
      %v276 = vmax.f32 %v238, 0.0
      %v277 = vmax.f32 %v243, 0.0
      %v278 = vmax.f32 %v248, 0.0
      %v279 = vmax.f32 %v253, 0.0
      %v280 = vmax.f32 %v258, 0.0
      %v281 = vmax.f32 %v263, 0.0
      %v282 = vmin.f32 %v266, 6.0
      %v283 = vmin.f32 %v267, 6.0
      %v284 = vmin.f32 %v268, 6.0
      %v285 = vmin.f32 %v269, 6.0
      %v286 = vmin.f32 %v270, 6.0
      %v287 = vmin.f32 %v271, 6.0
      %v288 = vmin.f32 %v272, 6.0
      %v289 = vmin.f32 %v273, 6.0
      %v290 = vmin.f32 %v274, 6.0
      %v291 = vmin.f32 %v275, 6.0
      %v292 = vmin.f32 %v276, 6.0
      %v293 = vmin.f32 %v277, 6.0
      %v294 = vmin.f32 %v278, 6.0
      %v295 = vmin.f32 %v279, 6.0
      %v296 = vmin.f32 %v280, 6.0
      %v297 = vmin.f32 %v281, 6.0
      %v298 = vld [vmem:[%s6] sm:$0x1]
      %v299 = vld [vmem:[#allocation6] sm:$0x1]
      %301 = vset.pattern.permute.xlu0 0
      %302 = vperm.xlu0 %301, %v299
      %v303 = vpop.permute.xlu0 %302
      %v305 = vlaneseq
      %v306 = vshrl.u32 %v305, 7
      %v307 = vsub.s32 0, %v306
      %v308 = vrot.slane %v303, %v307
      %309 = vmatprep.subr.mxu0 0.0
      %310 = vmatpush1.xpose.msra.mxu0 %v297
      %311 = vmatprep.subr.mxu0 0.0
      %312 = vmatpush1.xpose.msra.mxu0 %v296
      %313 = vmatprep.subr.mxu0 0.0
      %314 = vmatpush1.xpose.msra.mxu0 %v295
      %315 = vmatprep.subr.mxu0 0.0
      %316 = vmatpush1.xpose.msra.mxu0 %v294
      %317 = vmatprep.subr.mxu0 0.0
      %318 = vmatpush1.xpose.msra.mxu0 %v293
      %319 = vmatprep.subr.mxu0 0.0
      %320 = vmatpush1.xpose.msra.mxu0 %v292
      %321 = vmatprep.subr.mxu0 0.0
      %322 = vmatpush1.xpose.msra.mxu0 %v291
      %323 = vmatprep.subr.mxu0 0.0
      %324 = vmatpush1.xpose.msra.mxu0 %v290
      %325 = vmatprep.subr.mxu0 0.0
      %326 = vmatpush1.xpose.msra.mxu0 %v289
      %327 = vmatprep.subr.mxu0 0.0
      %328 = vmatpush1.xpose.msra.mxu0 %v288
      %329 = vmatprep.subr.mxu0 0.0
      %330 = vmatpush1.xpose.msra.mxu0 %v287
      %331 = vmatprep.subr.mxu0 0.0
      %332 = vmatpush1.xpose.msra.mxu0 %v286
      %333 = vmatprep.subr.mxu0 0.0
      %334 = vmatpush1.xpose.msra.mxu0 %v285
      %335 = vmatprep.subr.mxu0 0.0
      %336 = vmatpush1.xpose.msra.mxu0 %v284
      %337 = vmatprep.subr.mxu0 0.0
      %338 = vmatpush1.xpose.msra.mxu0 %v283
      %339 = vmatprep.subr.mxu0 0.0
      %340 = vmatpush1.xpose.msra.mxu0 %v282
      %341 = vmatprep.subr.mxu0 0.0
      %342 = vmatpush2.xpose.msra.mxu0 0.0
      %343 = vmatprep.subr.mxu0 0.0
      %344 = vmatpush2.xpose.msra.mxu0 0.0
      %345 = vmatprep.subr.mxu0 0.0
      %346 = vmatpush2.xpose.msra.mxu0 0.0
      %347 = vmatprep.subr.mxu0 0.0
      %348 = vmatpush2.xpose.msra.mxu0 0.0
      %349 = vmatprep.subr.mxu0 0.0
      %350 = vmatpush2.xpose.msra.mxu0 0.0
      %351 = vmatprep.subr.mxu0 0.0
      %352 = vmatpush2.xpose.msra.mxu0 0.0
      %353 = vmatprep.subr.mxu0 0.0
      %354 = vmatpush2.xpose.msra.mxu0 0.0
      %355 = vmatprep.subr.mxu0 0.0
      %356 = vmatpush2.xpose.msra.mxu0 0.0
      %357 = vmatprep.subr.mxu0 0.0
      %358 = vmatpush2.xpose.msra.mxu0 0.0
      %359 = vmatprep.subr.mxu0 0.0
      %360 = vmatpush2.xpose.msra.mxu0 0.0
      %361 = vmatprep.subr.mxu0 0.0
      %362 = vmatpush2.xpose.msra.mxu0 0.0
      %363 = vmatprep.subr.mxu0 0.0
      %364 = vmatpush2.xpose.msra.mxu0 0.0
      %365 = vmatprep.subr.mxu0 0.0
      %366 = vmatpush2.xpose.msra.mxu0 0.0
      %367 = vmatprep.subr.mxu0 0.0
      %368 = vmatpush2.xpose.msra.mxu0 0.0
      %369 = vmatprep.subr.mxu0 0.0
      %370 = vmatpush2.xpose.msra.mxu0 0.0
      %371 = vmatprep.subr.mxu0 0.0
      %372 = vmatpush2.xpose.msra.mxu0 0.0
      %373 = vmatprep.mubr.f32.mxu0 0.0
      %374 = vmatmul.mubr.f32.gmra.mxu0 %v298
      %v375 = vpop.f32.mrf.mxu0
      %v376 = vadd.f32 %v308, %v375
      %v377 = vpop.f32.mrf.mxu0
      %378 = vdwg.mxu0
      %v379 = vmax.f32 %v376, 0.0
      %v380 = vand.u32 2147483647, %v376
      %v381 = vsub.f32 0.0, %v380
      %v382 = vmul.f32 %v381, 1.442695
      %v383 = vpow.pop %v382
      %v384 = vadd.f32 %v383, 1.0
      %v385 = vlog2.pop %v384
      %v386 = vmul.f32 %v385, 0.6931472
      %v387 = vmul.f32 -0.5, %v383
      %v388 = vadd.f32 %v387, 1.0
      %v389 = vmul.f32 %v388, %v383
      %v390 = vand.u32 2147483647, %v383
      %vm391 = vcmp.lt.f32.partialorder %v390, 0.0004427343
      %v392 = vsel %vm391, %v389, %v386
      %v393 = vadd.f32 %v379, %v392
      %v394 = vadd.f32 %v393, 0.001
      %v395 = vlog2.pop %v394
      %v396 = vmul.f32 %v395, 0.6931472
      %v397 = vrsqrt.pop %v394
      %v398 = vmul.f32 %v394, %v397
      %vm399 = vcmp.eq.f32.partialorder %v394, inf
      %v400 = vsel %vm399, %v394, %v398
      %vm401 = vcmp.eq.f32.partialorder %v394, 0.0
      %v402 = vand.u32 %v394, 2147483648
      %v403 = vsel %vm401, %v402, %v400
      %404 = vst [vmem:[#allocation3] sm:$0x1] %v403
      %v405 = vadd.f32 %v396, 1.837877
      %v406 = vmul.f32 %v405, -0.5
      %407 = vst [vmem:[#allocation4] sm:$0x1] %v406
      %408 = vst [vmem:[#allocation11] sm:$0x1] %v396
      %v409 = vld [vmem:[%s0] sm:$0xff]
      %v410 = vld [vmem:[%s2] sm:$0xf]
      %v411 = vld [vmem:[%s3] sm:$0x1]
      %v413 = vlaneseq
      %v414 = vshrl.u32 %v413, 7
      %v415 = vsub.s32 0, %v414
      %v416 = vrot.slane %v411, %v415
      %v419 = vsel %vm68, %v409, 0
      %v422 = vsel %vm117, %v410, 0
      %424 = vmatprep.subr.mxu0 0.0
      %425 = vmatpush1.msra.mxu0 0.0
      %426 = vmatprep.subr.mxu0 0.0
      %427 = vmatpush1.msra.mxu0 0.0
      %428 = vmatprep.subr.mxu0 0.0
      %429 = vmatpush1.msra.mxu0 0.0
      %430 = vmatprep.subr.mxu0 0.0
      %431 = vmatpush1.msra.mxu0 0.0
      %432 = vmatprep.subr.mxu0 0.0
      %433 = vmatpush1.msra.mxu0 0.0
      %434 = vmatprep.subr.mxu0 0.0
      %435 = vmatpush1.msra.mxu0 0.0
      %436 = vmatprep.subr.mxu0 0.0
      %437 = vmatpush1.msra.mxu0 0.0
      %438 = vmatprep.subr.mxu0 0.0
      %439 = vmatpush1.msra.mxu0 0.0
      %440 = vmatprep.subr.mxu0 0.0
      %441 = vmatpush1.msra.mxu0 0.0
      %442 = vmatprep.subr.mxu0 0.0
      %443 = vmatpush1.msra.mxu0 0.0
      %444 = vmatprep.subr.mxu0 0.0
      %445 = vmatpush1.msra.mxu0 0.0
      %446 = vmatprep.subr.mxu0 0.0
      %447 = vmatpush1.msra.mxu0 0.0
      %448 = vmatprep.subr.mxu0 0.0
      %449 = vmatpush1.msra.mxu0 0.0
      %450 = vmatprep.subr.mxu0 0.0
      %451 = vmatpush1.msra.mxu0 0.0
      %452 = vmatprep.subr.mxu0 0.0
      %453 = vmatpush1.msra.mxu0 0.0
      %454 = vmatprep.subr.mxu0 0.0
      %455 = vmatpush1.msra.mxu0 %v422
      %456 = vmatprep.subr.mxu0 0.0
      %457 = vmatpush2.msra.mxu0 0.0
      %458 = vmatprep.subr.mxu0 0.0
      %459 = vmatpush2.msra.mxu0 0.0
      %460 = vmatprep.subr.mxu0 0.0
      %461 = vmatpush2.msra.mxu0 0.0
      %462 = vmatprep.subr.mxu0 0.0
      %463 = vmatpush2.msra.mxu0 0.0
      %464 = vmatprep.subr.mxu0 0.0
      %465 = vmatpush2.msra.mxu0 0.0
      %466 = vmatprep.subr.mxu0 0.0
      %467 = vmatpush2.msra.mxu0 0.0
      %468 = vmatprep.subr.mxu0 0.0
      %469 = vmatpush2.msra.mxu0 0.0
      %470 = vmatprep.subr.mxu0 0.0
      %471 = vmatpush2.msra.mxu0 0.0
      %472 = vmatprep.subr.mxu0 0.0
      %473 = vmatpush2.msra.mxu0 0.0
      %474 = vmatprep.subr.mxu0 0.0
      %475 = vmatpush2.msra.mxu0 0.0
      %476 = vmatprep.subr.mxu0 0.0
      %477 = vmatpush2.msra.mxu0 0.0
      %478 = vmatprep.subr.mxu0 0.0
      %479 = vmatpush2.msra.mxu0 0.0
      %480 = vmatprep.subr.mxu0 0.0
      %481 = vmatpush2.msra.mxu0 0.0
      %482 = vmatprep.subr.mxu0 0.0
      %483 = vmatpush2.msra.mxu0 0.0
      %484 = vmatprep.subr.mxu0 0.0
      %485 = vmatpush2.msra.mxu0 0.0
      %486 = vmatprep.subr.mxu0 0.0
      %487 = vmatpush2.msra.mxu0 0.0
      %488 = vmatprep.mubr.f32.mxu0 0.0
      %489 = vmatmul.mubr.f32.gmra.mxu0 %v419
      %v490 = vpop.f32.mrf.mxu0
      %v491 = vadd.f32 %v416, %v490
      %v492 = vpop.f32.mrf.mxu0
      %493 = vdwg.mxu0
      %v494 = vmax.f32 %v491, 0.0
      %v495 = vmin.f32 %v494, 6.0
      %v496 = vld [vmem:[%s4] sm:$0xff]
      %v497 = vld [vmem:[%s4 + $0x8] sm:$0xff]
      %v498 = vld [vmem:[%s4 + $0x10] sm:$0xff]
      %v499 = vld [vmem:[%s4 + $0x18] sm:$0xff]
      %v500 = vld [vmem:[%s4 + $0x20] sm:$0xff]
      %v501 = vld [vmem:[%s4 + $0x28] sm:$0xff]
      %v502 = vld [vmem:[%s4 + $0x30] sm:$0xff]
      %v503 = vld [vmem:[%s4 + $0x38] sm:$0xff]
      %v504 = vld [vmem:[%s4 + $0x40] sm:$0xff]
      %v505 = vld [vmem:[%s4 + $0x48] sm:$0xff]
      %v506 = vld [vmem:[%s4 + $0x50] sm:$0xff]
      %v507 = vld [vmem:[%s4 + $0x58] sm:$0xff]
      %v508 = vld [vmem:[%s4 + $0x60] sm:$0xff]
      %v509 = vld [vmem:[%s4 + $0x68] sm:$0xff]
      %v510 = vld [vmem:[%s4 + $0x70] sm:$0xff]
      %v511 = vld [vmem:[%s4 + $0x78] sm:$0xff]
      %v512 = vld [vmem:[#allocation5] sm:$0x1]
      %v514 = vlaneseq
      %v515 = vshrl.u32 %v514, 7
      %v516 = vsub.s32 0, %v515
      %v517 = vrot.slane %v512, %v516
      %519 = vmatprep.subr.mxu0 0.0
      %520 = vmatpush1.msra.mxu0 %v511
      %521 = vmatprep.subr.mxu0 0.0
      %522 = vmatpush1.msra.mxu0 %v510
      %523 = vmatprep.subr.mxu0 0.0
      %524 = vmatpush1.msra.mxu0 %v509
      %525 = vmatprep.subr.mxu0 0.0
      %526 = vmatpush1.msra.mxu0 %v508
      %527 = vmatprep.subr.mxu0 0.0
      %528 = vmatpush1.msra.mxu0 %v507
      %529 = vmatprep.subr.mxu0 0.0
      %530 = vmatpush1.msra.mxu0 %v506
      %531 = vmatprep.subr.mxu0 0.0
      %532 = vmatpush1.msra.mxu0 %v505
      %533 = vmatprep.subr.mxu0 0.0
      %534 = vmatpush1.msra.mxu0 %v504
      %535 = vmatprep.subr.mxu0 0.0
      %536 = vmatpush1.msra.mxu0 %v503
      %537 = vmatprep.subr.mxu0 0.0
      %538 = vmatpush1.msra.mxu0 %v502
      %539 = vmatprep.subr.mxu0 0.0
      %540 = vmatpush1.msra.mxu0 %v501
      %541 = vmatprep.subr.mxu0 0.0
      %542 = vmatpush1.msra.mxu0 %v500
      %543 = vmatprep.subr.mxu0 0.0
      %544 = vmatpush1.msra.mxu0 %v499
      %545 = vmatprep.subr.mxu0 0.0
      %546 = vmatpush1.msra.mxu0 %v498
      %547 = vmatprep.subr.mxu0 0.0
      %548 = vmatpush1.msra.mxu0 %v497
      %549 = vmatprep.subr.mxu0 0.0
      %550 = vmatpush1.msra.mxu0 %v496
      %551 = vmatprep.subr.mxu0 0.0
      %552 = vmatpush2.msra.mxu0 0.0
      %553 = vmatprep.subr.mxu0 0.0
      %554 = vmatpush2.msra.mxu0 0.0
      %555 = vmatprep.subr.mxu0 0.0
      %556 = vmatpush2.msra.mxu0 0.0
      %557 = vmatprep.subr.mxu0 0.0
      %558 = vmatpush2.msra.mxu0 0.0
      %559 = vmatprep.subr.mxu0 0.0
      %560 = vmatpush2.msra.mxu0 0.0
      %561 = vmatprep.subr.mxu0 0.0
      %562 = vmatpush2.msra.mxu0 0.0
      %563 = vmatprep.subr.mxu0 0.0
      %564 = vmatpush2.msra.mxu0 0.0
      %565 = vmatprep.subr.mxu0 0.0
      %566 = vmatpush2.msra.mxu0 0.0
      %567 = vmatprep.subr.mxu0 0.0
      %568 = vmatpush2.msra.mxu0 0.0
      %569 = vmatprep.subr.mxu0 0.0
      %570 = vmatpush2.msra.mxu0 0.0
      %571 = vmatprep.subr.mxu0 0.0
      %572 = vmatpush2.msra.mxu0 0.0
      %573 = vmatprep.subr.mxu0 0.0
      %574 = vmatpush2.msra.mxu0 0.0
      %575 = vmatprep.subr.mxu0 0.0
      %576 = vmatpush2.msra.mxu0 0.0
      %577 = vmatprep.subr.mxu0 0.0
      %578 = vmatpush2.msra.mxu0 0.0
      %579 = vmatprep.subr.mxu0 0.0
      %580 = vmatpush2.msra.mxu0 0.0
      %581 = vmatprep.subr.mxu0 0.0
      %582 = vmatpush2.msra.mxu0 0.0
      %583 = vmatprep.mubr.f32.mxu0 0.0
      %584 = vmatmul.mubr.f32.gmra.mxu0 %v495
      %v585 = vpop.f32.mrf.mxu0
      %v586 = vadd.f32 %v517, %v585
      %v587 = vpop.f32.mrf.mxu0
      %588 = vdwg.mxu0
      %v589 = vmax.f32 %v586, 0.0
      %v590 = vmin.f32 %v589, 6.0
      %v591 = vmul.f32 %v590, 2.0
      %vm592 = vcmask 7168
      %593 = vst.msk [vmem:[#allocation2] sm:$0xff] %vm592, %v591
    $region37: #{tpu_custom_call.1} parent=1 // pred_fallthru
      _
    %s594 = smul.u32 0, 8
    %s595 = scalar_lea.vmem [#allocation2], %s594
    %v596 = vld [vmem:[%s595] sm:$0xff]
    %v597 = vld [vmem:[%s1] sm:$0xff]
    %v598 = vld [vmem:[#allocation3] sm:$0x1]
    %v600 = vlaneseq
    %v601 = vshrl.u32 %v600, 7
    %v602 = vsub.s32 0, %v601
    %v603 = vrot.slane %v598, %v602
    %v605 = vmul.f32 %v603, %v597
    %607 = vset.pattern.permute.xlu0 0
    %608 = vperm.xlu0 %607, %v596
    %v609 = vpop.permute.xlu0 %608
    %v611 = vadd.f32 %v609, %v605
    %612 = vst [vmem:[#allocation7] sm:$0xff] %v611
    %v613 = vld [vmem:[#allocation4] sm:$0x1]
    %v614 = vmul.f32 %v597, %v597
    %v615 = vmul.f32 %v614, 0.5
    %v617 = vlaneseq
    %v618 = vshrl.u32 %v617, 7
    %v619 = vsub.s32 0, %v618
    %v620 = vrot.slane %v613, %v619
    %v622 = vsub.f32 %v620, %v615
    %623 = vst [vmem:[#allocation9] sm:$0xff] %v622
    // Predicated region
    $region38: #{tpu_custom_call.1} parent=1 // pred_check
      _
    $region39: #{tpu_custom_call.1} parent=1 // pred_check_branch
      %625 = sbr.rel (0) target = $region41
    $region40: #{tpu_custom_call.1} parent=1 // pred_region
      %s627 = ssub.s32 128, 128
      %628 = vsyncadd [#allocation8], %s627
      %s630 = sshll.u32 [#allocation7], 4
      %s631 = int_to_ptr.vmem [resolvable:$true] %s630
      %633 = dma.vmem_to_hbm [thread:$0]  %s631, 128, %s8, [#allocation8]
    $region41: #{tpu_custom_call.1} parent=1 // pred_fallthru
      _
    // Predicated region
    $region42: #{tpu_custom_call.1} parent=1 // pred_check
      _
    $region43: #{tpu_custom_call.1} parent=1 // pred_check_branch
      %635 = sbr.rel (0) target = $region45
    $region44: #{tpu_custom_call.1} parent=1 // pred_region
      %s637 = ssub.s32 128, 128
      %638 = vsyncadd [#allocation10], %s637
      %s640 = sshll.u32 [#allocation9], 4
      %s641 = int_to_ptr.vmem [resolvable:$true] %s640
      %643 = dma.vmem_to_hbm [thread:$0]  %s641, 128, %s9, [#allocation10]
    $region45: #{tpu_custom_call.1} parent=1 // pred_fallthru
      _
    // Predicated region
    $region46: #{tpu_custom_call.1} parent=1 // pred_check
      _
    $region47: #{tpu_custom_call.1} parent=1 // pred_check_branch
      %645 = sbr.rel (0) target = $region49
    $region48: #{tpu_custom_call.1} parent=1 // pred_region
      %s647 = ssub.s32 16, 16
      %648 = vsyncadd [#allocation10], %s647
      %s650 = sshll.u32 [#allocation11], 4
      %s651 = int_to_ptr.vmem [resolvable:$true] %s650
      %653 = dma.vmem_to_hbm [thread:$0]  %s651, 16, %s10, [#allocation10]
    $region49: #{tpu_custom_call.1} parent=1 // pred_fallthru
      _
    // Predicated region
    $region50: #{tpu_custom_call.1} parent=1 // pred_check
      _
    $region51: #{tpu_custom_call.1} parent=1 // pred_check_branch
      %655 = sbr.rel (0) target = $region53
    $region52: #{tpu_custom_call.1} parent=1 // pred_region
      %656 = dma.done [#allocation8], 128
    $region53: #{tpu_custom_call.1} parent=1 // pred_fallthru
      _
    // Predicated region
    $region54: #{tpu_custom_call.1} parent=1 // pred_check
      _
    $region55: #{tpu_custom_call.1} parent=1 // pred_check_branch
      %658 = sbr.rel (0) target = $region57
    $region56: #{tpu_custom_call.1} parent=1 // pred_region
      %659 = dma.done [#allocation10], 128
    $region57: #{tpu_custom_call.1} parent=1 // pred_fallthru
      _
    // Predicated region
    $region58: #{tpu_custom_call.1} parent=1 // pred_check
      _
    $region59: #{tpu_custom_call.1} parent=1 // pred_check_branch
      %661 = sbr.rel (0) target = $region61
    $region60: #{tpu_custom_call.1} parent=1 // pred_region
      %662 = dma.done [#allocation10], 16
    $region61: #{tpu_custom_call.1} parent=1 // pred_fallthru
      _
    %663 = vsyncpa [#allocation8], 1
    %664 = vsyncpa [#allocation10], 1

</llo_original>
